<compile_context>
chip_gen: v6e
topology: v6e:2x2x1
jax: 0.10.0
libtpu: 0.0.40
codegen_flags: <defaults>
</compile_context>

<pallas_src>
import functools

import jax
import jax.numpy as jnp
from jax import lax
from jax.experimental import pallas as pl
from jax.experimental.pallas import tpu as pltpu

LN_EPS = 1e-5  # nn.LayerNorm default eps


# --------------------------------------------------------------------------
# Kernel 1: fused Fea2Weight MLP + grouped LayerNorm (+ /inC pre-folded)
# --------------------------------------------------------------------------
def _f2w_ln_kernel(f_ref, w1_ref, b1_ref, w2_ref, b2_ref,
                   ga_ref, gb_ref, g_ref, b_ref, o_ref):
    # f:(N,F) w1:(F,256) b1:(1,256) w2:(256,KK) b2:(1,KK)
    # ga:(KK,outC) one-hot group matrix scaled by 1/G  (group average)
    # gb:(outC,KK) 0/1 group matrix                    (group broadcast)
    # g,b:(1,KK)  gamma/beta tiled over outC and pre-divided by inC
    # o:(N,KK)
    h = jnp.dot(f_ref[...], w1_ref[...], preferred_element_type=jnp.float32)
    h = jnp.maximum(h + b1_ref[...], 0.0)                        # ReLU(inplace)
    raw = jnp.dot(h, w2_ref[...], preferred_element_type=jnp.float32) + b2_ref[...]

    # Grouped LayerNorm over each [inC,k,k] block of the flat row, expressed
    # as matmuls against the group matrices (no in-kernel reshape needed).
    ga = ga_ref[...]
    gb = gb_ref[...]
    mean = jnp.dot(jnp.dot(raw, ga, preferred_element_type=jnp.float32), gb,
                   preferred_element_type=jnp.float32)           # per-lane group mean
    cen = raw - mean
    var = jnp.dot(jnp.dot(cen * cen, ga, preferred_element_type=jnp.float32), gb,
                  preferred_element_type=jnp.float32)            # biased, like torch
    xn = cen * lax.rsqrt(var + LN_EPS)
    o_ref[...] = xn * g_ref[...] + b_ref[...]


# --------------------------------------------------------------------------
# Kernel 2: per-sample dynamic-weight conv2d as K*K MXU matmuls,
#           lane-dense flattened-spatial layout, grid over (batch, sample).
# --------------------------------------------------------------------------
def _dynconv_kernel(x_ref, w_ref, o_ref, *, K, Wp):
    # x:(1,Cin,S) flattened spatial (lane-dense); w:(1,K*K,Cout,Cin); o:(1,1,Cout,S)
    xs = x_ref[0]
    S = xs.shape[-1]
    Cout = o_ref.shape[2]
    acc = jnp.zeros((Cout, S), jnp.float32)
    # K*K static taps (static shifts are required for the lane rotation, so
    # this stays a small Python unroll).  Output position p = r*Wp + c lines
    # up with input pixel (r+ki, c+kj); wrapped lanes only land on positions
    # outside the valid (Hout, Wout) window, which the wrapper slices away.
    for ki in range(K):
        for kj in range(K):
            d = ki * Wp + kj
            if d == 0:
                shifted = xs
            else:  # lane-rotate left by d (== jnp.roll(xs, -d, axis=1))
                shifted = jnp.concatenate([xs[:, d:], xs[:, :d]], axis=1)
            w_tap = w_ref[0, ki * K + kj]                        # (Cout, Cin)
            acc = acc + jnp.dot(w_tap, shifted,
                                preferred_element_type=jnp.float32)
    o_ref[0, 0] = acc.astype(o_ref.dtype)


# --------------------------------------------------------------------------
# Pallas wrappers
# --------------------------------------------------------------------------
def f2w_ln_pallas(features, params, *, inC, outC, kernel_size):
    N = features.shape[0]
    G = inC * kernel_size * kernel_size
    KK = outC * G
    grp = jnp.arange(KK) // G
    ga = (grp[:, None] == jnp.arange(outC)[None, :]).astype(jnp.float32) / G
    gb = (grp[None, :] == jnp.arange(outC)[:, None]).astype(jnp.float32)
    gamma_t = jnp.tile(params["gamma"], (1, outC)) / inC         # fold /inC
    beta_t = jnp.tile(params["beta"], (1, outC)) / inC
    # TODO(synk): for non-toy inC/outC, tile the (256,KK) matmul over a grid
    # axis (accumulator pattern) / bf16 operands instead of whole-array VMEM.
    return pl.pallas_call(
        _f2w_ln_kernel,
        out_shape=jax.ShapeDtypeStruct((N, KK), jnp.float32),
        in_specs=[pl.BlockSpec(memory_space=pltpu.MemorySpace.VMEM)] * 9,
        out_specs=pl.BlockSpec(memory_space=pltpu.MemorySpace.VMEM),
    )(features, params["w1"], params["b1"], params["w2"], params["b2"],
      ga, gb, gamma_t, beta_t)


def dynconv_pallas(x, w_taps, padding=0):
    # x: (B, Cin, H, W) NCHW ; w_taps: (N, K*K, Cout, Cin) ; stride 1
    if padding > 0:  # pad once, hoisted out of the per-sample loop
        x = jnp.pad(x, ((0, 0), (0, 0), (padding, padding), (padding, padding)))
    B, Cin, Hp, Wp = x.shape
    N, KK, Cout, _ = w_taps.shape
    K = int(round(KK ** 0.5))
    Hout, Wout = Hp - K + 1, Wp - K + 1
    S = Hp * Wp
    x_flat = x.reshape(B, Cin, S)                 # lane-dense spatial layout
    out = pl.pallas_call(
        functools.partial(_dynconv_kernel, K=K, Wp=Wp),
        out_shape=jax.ShapeDtypeStruct((N, B, Cout, S), x.dtype),
        grid=(B, N),
        in_specs=[
            pl.BlockSpec((1, Cin, S), lambda b, n: (b, 0, 0)),
            pl.BlockSpec((1, KK, Cout, Cin), lambda b, n: (n, 0, 0, 0)),
        ],
        out_specs=pl.BlockSpec((1, 1, Cout, S), lambda b, n: (n, b, 0, 0)),
        compiler_params=pltpu.CompilerParams(
            dimension_semantics=("parallel", "parallel")),
    )(x_flat, w_taps)
    # slice the valid window back out (glue)
    return out.reshape(N, B, Cout, Hp, Wp)[:, :, :, :Hout, :Wout]


# --------------------------------------------------------------------------
# Wconv module (parameters + forward)
# --------------------------------------------------------------------------
def init_wconv_params(key, feature_num, inC, outC, kernel_size):
    K = kernel_size * kernel_size * inC * outC
    G = kernel_size * kernel_size * inC
    k1, k2, k3, k4, k5, k6 = jax.random.split(key, 6)
    return dict(
        w1=jax.random.normal(k1, (feature_num, 256), jnp.float32) / jnp.sqrt(feature_num),
        b1=0.01 * jax.random.normal(k2, (1, 256), jnp.float32),
        w2=jax.random.normal(k3, (256, K), jnp.float32) / jnp.sqrt(256.0),
        b2=0.01 * jax.random.normal(k4, (1, K), jnp.float32),
        gamma=1.0 + 0.1 * jax.random.normal(k5, (1, G), jnp.float32),  # LayerNorm weight
        beta=0.1 * jax.random.normal(k6, (1, G), jnp.float32),         # LayerNorm bias
    )


def wconv_forward(params, x, features, *, inC, outC, kernel_size, padding=0):
    # TODO(synk): .to(device)/get_device() are torch device management; no-op in JAX.
    if features.ndim == 1:
        features = features[None, :]
    N = features.shape[0]
    flat = f2w_ln_pallas(features, params, inC=inC, outC=outC,
                         kernel_size=kernel_size)                # (N, outC*inC*k*k)
    w = flat.reshape(N, outC, inC, kernel_size, kernel_size)     # OIHW per sample
    w_taps = jnp.transpose(w, (0, 3, 4, 1, 2)).reshape(
        N, kernel_size * kernel_size, outC, inC)                 # (N, K*K, Cout, Cin)
    out = dynconv_pallas(x, w_taps, padding=padding)             # (N, B, Cout, Hout, Wout)
    return [out[i] for i in range(N)]


# --------------------------------------------------------------------------
# Pure-JAX reference (for correctness check)
# --------------------------------------------------------------------------
def wconv_reference(params, x, features, *, inC, outC, kernel_size, padding=0):
    if features.ndim == 1:
        features = features[None, :]
    N = features.shape[0]
    h = jnp.maximum(features @ params["w1"] + params["b1"], 0.0)
    raw = h @ params["w2"] + params["b2"]
    w = raw.reshape(N, outC, inC, kernel_size, kernel_size)
    mean = w.mean(axis=(-3, -2, -1), keepdims=True)
    var = ((w - mean) ** 2).mean(axis=(-3, -2, -1), keepdims=True)
    g = params["gamma"].reshape(inC, kernel_size, kernel_size)
    b = params["beta"].reshape(inC, kernel_size, kernel_size)
    w = ((w - mean) * lax.rsqrt(var + LN_EPS) * g + b) / inC
    outs = []
    for i in range(N):
        outs.append(
            lax.conv_general_dilated(
                x, w[i], window_strides=(1, 1),
                padding=[(padding, padding), (padding, padding)],
                dimension_numbers=("NCHW", "OIHW", "NCHW"),
            )
        )
    return outs


if __name__ == "__main__":
    feature_num, inC, outC, ksz, pad = 8, 4, 4, 3, 0
    B, H, W, N = 2, 16, 16, 2

    key = jax.random.PRNGKey(0)
    kp, kx, kf = jax.random.split(key, 3)
    params = init_wconv_params(kp, feature_num, inC, outC, ksz)
    x = jax.random.normal(kx, (B, inC, H, W), jnp.float32)        # NCHW input
    features = jax.random.normal(kf, (N, feature_num), jnp.float32)

    outs = wconv_forward(params, x, features, inC=inC, outC=outC,
                         kernel_size=ksz, padding=pad)
    outs = [jax.block_until_ready(o) for o in outs]

    refs = wconv_reference(params, x, features, inC=inC, outC=outC,
                           kernel_size=ksz, padding=pad)
    for o, r in zip(outs, refs):
        assert o.shape == r.shape, (o.shape, r.shape)
        err = float(jnp.max(jnp.abs(o - r)))
        assert err < 1e-3, f"max abs err {err}"

    print("KERNEL_OK")
</pallas_src>

<mosaic_0001>
module attributes {stable_mosaic.version = 11 : i64} {
  func.func @_f2w_ln_kernel(%arg0: memref<2x8xf32, #tpu.memory_space<vmem>>, %arg1: memref<8x256xf32, #tpu.memory_space<vmem>>, %arg2: memref<1x256xf32, #tpu.memory_space<vmem>>, %arg3: memref<256x144xf32, #tpu.memory_space<vmem>>, %arg4: memref<1x144xf32, #tpu.memory_space<vmem>>, %arg5: memref<144x4xf32, #tpu.memory_space<vmem>>, %arg6: memref<4x144xf32, #tpu.memory_space<vmem>>, %arg7: memref<1x144xf32, #tpu.memory_space<vmem>>, %arg8: memref<1x144xf32, #tpu.memory_space<vmem>>, %arg9: memref<2x144xf32, #tpu.memory_space<vmem>>) attributes {dimension_semantics = [], scalar_prefetch = 0 : i64, scratch_operands = 0 : i64, tpu.core_type = #tpu.core_type<tc>} {
    %c0 = arith.constant 0 : index
    %c0_0 = arith.constant 0 : index
    %0 = vector.load %arg0[%c0, %c0_0] : memref<2x8xf32, #tpu.memory_space<vmem>>, vector<2x8xf32>
    %c0_1 = arith.constant 0 : index
    %c0_2 = arith.constant 0 : index
    %1 = vector.load %arg1[%c0_1, %c0_2] : memref<8x256xf32, #tpu.memory_space<vmem>>, vector<8x256xf32>
    %cst = arith.constant dense<0.000000e+00> : vector<2x256xf32>
    %2 = tpu.matmul %0, %1, %cst {dimension_numbers = #tpu.dot_dimension_numbers<[1], [0], [0], [1], [0, 0, 1, 1], [], []>} : vector<2x8xf32>, vector<8x256xf32>, vector<2x256xf32> -> vector<2x256xf32>
    %c0_3 = arith.constant 0 : index
    %c0_4 = arith.constant 0 : index
    %3 = vector.load %arg2[%c0_3, %c0_4] : memref<1x256xf32, #tpu.memory_space<vmem>>, vector<1x256xf32>
    %4 = vector.broadcast %3 : vector<1x256xf32> to vector<2x256xf32>
    %5 = arith.addf %2, %4 : vector<2x256xf32>
    %cst_5 = arith.constant 0.000000e+00 : f32
    %6 = vector.broadcast %cst_5 : f32 to vector<2x256xf32>
    %7 = arith.maximumf %5, %6 : vector<2x256xf32>
    %c0_6 = arith.constant 0 : index
    %c0_7 = arith.constant 0 : index
    %8 = vector.load %arg3[%c0_6, %c0_7] : memref<256x144xf32, #tpu.memory_space<vmem>>, vector<256x144xf32>
    %cst_8 = arith.constant dense<0.000000e+00> : vector<2x144xf32>
    %9 = tpu.matmul %7, %8, %cst_8 {dimension_numbers = #tpu.dot_dimension_numbers<[1], [0], [0], [1], [0, 0, 1, 1], [], []>} : vector<2x256xf32>, vector<256x144xf32>, vector<2x144xf32> -> vector<2x144xf32>
    %c0_9 = arith.constant 0 : index
    %c0_10 = arith.constant 0 : index
    %10 = vector.load %arg4[%c0_9, %c0_10] : memref<1x144xf32, #tpu.memory_space<vmem>>, vector<1x144xf32>
    %11 = vector.broadcast %10 : vector<1x144xf32> to vector<2x144xf32>
    %12 = arith.addf %9, %11 : vector<2x144xf32>
    %c0_11 = arith.constant 0 : index
    %c0_12 = arith.constant 0 : index
    %13 = vector.load %arg5[%c0_11, %c0_12] : memref<144x4xf32, #tpu.memory_space<vmem>>, vector<144x4xf32>
    %c0_13 = arith.constant 0 : index
    %c0_14 = arith.constant 0 : index
    %14 = vector.load %arg6[%c0_13, %c0_14] : memref<4x144xf32, #tpu.memory_space<vmem>>, vector<4x144xf32>
    %cst_15 = arith.constant dense<0.000000e+00> : vector<2x4xf32>
    %15 = tpu.matmul %12, %13, %cst_15 {dimension_numbers = #tpu.dot_dimension_numbers<[1], [0], [0], [1], [0, 0, 1, 1], [], []>} : vector<2x144xf32>, vector<144x4xf32>, vector<2x4xf32> -> vector<2x4xf32>
    %cst_16 = arith.constant dense<0.000000e+00> : vector<2x144xf32>
    %16 = tpu.matmul %15, %14, %cst_16 {dimension_numbers = #tpu.dot_dimension_numbers<[1], [0], [0], [1], [0, 0, 1, 1], [], []>} : vector<2x4xf32>, vector<4x144xf32>, vector<2x144xf32> -> vector<2x144xf32>
    %17 = arith.subf %12, %16 : vector<2x144xf32>
    %18 = arith.mulf %17, %17 : vector<2x144xf32>
    %cst_17 = arith.constant dense<0.000000e+00> : vector<2x4xf32>
    %19 = tpu.matmul %18, %13, %cst_17 {dimension_numbers = #tpu.dot_dimension_numbers<[1], [0], [0], [1], [0, 0, 1, 1], [], []>} : vector<2x144xf32>, vector<144x4xf32>, vector<2x4xf32> -> vector<2x4xf32>
    %cst_18 = arith.constant dense<0.000000e+00> : vector<2x144xf32>
    %20 = tpu.matmul %19, %14, %cst_18 {dimension_numbers = #tpu.dot_dimension_numbers<[1], [0], [0], [1], [0, 0, 1, 1], [], []>} : vector<2x4xf32>, vector<4x144xf32>, vector<2x144xf32> -> vector<2x144xf32>
    %cst_19 = arith.constant 9.99999974E-6 : f32
    %21 = vector.broadcast %cst_19 : f32 to vector<2x144xf32>
    %22 = arith.addf %20, %21 : vector<2x144xf32>
    %23 = math.rsqrt %22 : vector<2x144xf32>
    %24 = arith.mulf %17, %23 : vector<2x144xf32>
    %c0_20 = arith.constant 0 : index
    %c0_21 = arith.constant 0 : index
    %25 = vector.load %arg7[%c0_20, %c0_21] : memref<1x144xf32, #tpu.memory_space<vmem>>, vector<1x144xf32>
    %26 = vector.broadcast %25 : vector<1x144xf32> to vector<2x144xf32>
    %27 = arith.mulf %24, %26 : vector<2x144xf32>
    %c0_22 = arith.constant 0 : index
    %c0_23 = arith.constant 0 : index
    %28 = vector.load %arg8[%c0_22, %c0_23] : memref<1x144xf32, #tpu.memory_space<vmem>>, vector<1x144xf32>
    %29 = vector.broadcast %28 : vector<1x144xf32> to vector<2x144xf32>
    %30 = arith.addf %27, %29 : vector<2x144xf32>
    %c0_24 = arith.constant 0 : index
    %c0_25 = arith.constant 0 : index
    %31 = vector.load %arg9[%c0_24, %c0_25] : memref<2x144xf32, #tpu.memory_space<vmem>>, vector<2x144xf32>
    tpu.vector_store %arg9[%c0_24, %c0_25], %30 {strides = array<i32>} : memref<2x144xf32, #tpu.memory_space<vmem>>, vector<2x144xf32>,
    return
  }
}

</mosaic_0001>

<llo_original>
// kernel: tpu_custom_call.1
$region0: #{tpu_custom_call.1}
  #allocation0 [shape = 'u32[]', space=smem, size = 0x4, offset = 0x4, fixed_abs, tag = 'smem constant byte address 0x4 - core index']
  #allocation1 [shape = 'u32[144,128]{1,0:T(1,128)}', space=vmem, size = 0x12000, scoped, tag = 'internal scratch']
  %s0 = inlined_call_operand.vmem [shape: f32[2,8], index: 0, kind: input, shape index: {}]
  %s1 = inlined_call_operand.vmem [shape: f32[8,256], index: 1, kind: input, shape index: {}]
  %s2 = inlined_call_operand.vmem [shape: f32[1,256], index: 2, kind: input, shape index: {}]
  %s3 = inlined_call_operand.vmem [shape: f32[256,144], index: 3, kind: input, shape index: {}]
  %s4 = inlined_call_operand.vmem [shape: f32[1,144], index: 4, kind: input, shape index: {}]
  %s5 = inlined_call_operand.vmem [shape: f32[144,4], index: 5, kind: input, shape index: {}]
  %s6 = inlined_call_operand.vmem [shape: f32[4,144], index: 6, kind: input, shape index: {}]
  %s7 = inlined_call_operand.vmem [shape: f32[1,144], index: 7, kind: input, shape index: {}]
  %s8 = inlined_call_operand.vmem [shape: f32[1,144], index: 8, kind: input, shape index: {}]
  %s9 = inlined_call_operand.hbm [shape: f32[2,144], index: 9, kind: output, shape index: {}]
  %s10 = sld [smem:[#allocation0]]
  $region46: #{tpu_custom_call.1} parent=0
    _
  %s12 = ssub.s32 1, %s10
  %s13 = scalar_select 0, %s12, %s10
  $region1: #{tpu_custom_call.1} parent=0
    #allocation2 [shape = 'u8[2048]{0}', space=vmem, size = 0x800, scoped, tag = 'output window, operand 0, single buffered']
    #allocation3 [shape = 's32[1]{0}', space=sflag, size = 0x4, scoped, tag = 'scoped memory for tpu_custom_call.1']
    %14 = vsyncpa [#allocation3], 0
    // Predicated region
    $region2: #{tpu_custom_call.1} parent=1 // pred_check
      _
    $region3: #{tpu_custom_call.1} parent=1 // pred_check_branch
      %16 = sbr.rel (0) target = $region5
    $region4: #{tpu_custom_call.1} parent=1 // pred_region
      _
    $region5: #{tpu_custom_call.1} parent=1 // pred_fallthru
      _
    // Predicated region
    $region6: #{tpu_custom_call.1} parent=1 // pred_check
      _
    $region7: #{tpu_custom_call.1} parent=1 // pred_check_branch
      %18 = sbr.rel (0) target = $region9
    $region8: #{tpu_custom_call.1} parent=1 // pred_region
      _
    $region9: #{tpu_custom_call.1} parent=1 // pred_fallthru
      _
    // Predicated region
    $region10: #{tpu_custom_call.1} parent=1 // pred_check
      _
    $region11: #{tpu_custom_call.1} parent=1 // pred_check_branch
      %20 = sbr.rel (0) target = $region13
    $region12: #{tpu_custom_call.1} parent=1 // pred_region
      _
    $region13: #{tpu_custom_call.1} parent=1 // pred_fallthru
      _
    // Predicated region
    $region14: #{tpu_custom_call.1} parent=1 // pred_check
      _
    $region15: #{tpu_custom_call.1} parent=1 // pred_check_branch
      %22 = sbr.rel (0) target = $region17
    $region16: #{tpu_custom_call.1} parent=1 // pred_region
      _
    $region17: #{tpu_custom_call.1} parent=1 // pred_fallthru
      _
    // Predicated region
    $region18: #{tpu_custom_call.1} parent=1 // pred_check
      _
    $region19: #{tpu_custom_call.1} parent=1 // pred_check_branch
      %24 = sbr.rel (0) target = $region21
    $region20: #{tpu_custom_call.1} parent=1 // pred_region
      _
    $region21: #{tpu_custom_call.1} parent=1 // pred_fallthru
      _
    // Predicated region
    $region22: #{tpu_custom_call.1} parent=1 // pred_check
      _
    $region23: #{tpu_custom_call.1} parent=1 // pred_check_branch
      %26 = sbr.rel (0) target = $region25
    $region24: #{tpu_custom_call.1} parent=1 // pred_region
      _
    $region25: #{tpu_custom_call.1} parent=1 // pred_fallthru
      _
    // Predicated region
    $region26: #{tpu_custom_call.1} parent=1 // pred_check
      _
    $region27: #{tpu_custom_call.1} parent=1 // pred_check_branch
      %28 = sbr.rel (0) target = $region29
    $region28: #{tpu_custom_call.1} parent=1 // pred_region
      _
    $region29: #{tpu_custom_call.1} parent=1 // pred_fallthru
      _
    // Predicated region
    $region30: #{tpu_custom_call.1} parent=1 // pred_check
      _
    $region31: #{tpu_custom_call.1} parent=1 // pred_check_branch
      %30 = sbr.rel (0) target = $region33
    $region32: #{tpu_custom_call.1} parent=1 // pred_region
      _
    $region33: #{tpu_custom_call.1} parent=1 // pred_fallthru
      _
    // Predicated region
    $region34: #{tpu_custom_call.1} parent=1 // pred_check
      _
    $region35: #{tpu_custom_call.1} parent=1 // pred_check_branch
      %32 = sbr.rel (0) target = $region37
    $region36: #{tpu_custom_call.1} parent=1 // pred_region
      _
    $region37: #{tpu_custom_call.1} parent=1 // pred_fallthru
      _
    %v33 = vld [vmem:[%s0] sm:$0x3]
    %v34 = vld [vmem:[%s1] sm:$0xff]
    %v35 = vld [vmem:[%s1 + $0x8] sm:$0xff]
    %v36 = vld [vmem:[%s2] sm:$0x3]
    %v38 = vlaneseq
    %v39 = vshrl.u32 %v38, 7
    %v40 = vsub.s32 0, %v39
    %v41 = vrot.slane %v36, %v40
    %v42 = vlaneseq
    %v43 = vshrl.u32 %v42, 7
    %v44 = vsub.s32 1, %v43
    %v45 = vrot.slane %v36, %v44
    %vm48 = vcmask 64512
    %v50 = vsel %vm48, %v33, 0
    %52 = vmatprep.subr.mxu0 0.0
    %53 = vmatpush1.msra.mxu0 0.0
    %54 = vmatprep.subr.mxu0 0.0
    %55 = vmatpush1.msra.mxu0 0.0
    %56 = vmatprep.subr.mxu0 0.0
    %57 = vmatpush1.msra.mxu0 0.0
    %58 = vmatprep.subr.mxu0 0.0
    %59 = vmatpush1.msra.mxu0 0.0
    %60 = vmatprep.subr.mxu0 0.0
    %61 = vmatpush1.msra.mxu0 0.0
    %62 = vmatprep.subr.mxu0 0.0
    %63 = vmatpush1.msra.mxu0 0.0
    %64 = vmatprep.subr.mxu0 0.0
    %65 = vmatpush1.msra.mxu0 0.0
    %66 = vmatprep.subr.mxu0 0.0
    %67 = vmatpush1.msra.mxu0 0.0
    %68 = vmatprep.subr.mxu0 0.0
    %69 = vmatpush1.msra.mxu0 0.0
    %70 = vmatprep.subr.mxu0 0.0
    %71 = vmatpush1.msra.mxu0 0.0
    %72 = vmatprep.subr.mxu0 0.0
    %73 = vmatpush1.msra.mxu0 0.0
    %74 = vmatprep.subr.mxu0 0.0
    %75 = vmatpush1.msra.mxu0 0.0
    %76 = vmatprep.subr.mxu0 0.0
    %77 = vmatpush1.msra.mxu0 0.0
    %78 = vmatprep.subr.mxu0 0.0
    %79 = vmatpush1.msra.mxu0 0.0
    %80 = vmatprep.subr.mxu0 0.0
    %81 = vmatpush1.msra.mxu0 0.0
    %82 = vmatprep.subr.mxu0 %v35
    %83 = vmatpush1.msra.mxu0 %v34
    %84 = vmatprep.subr.mxu0 0.0
    %85 = vmatpush2.msra.mxu0 0.0
    %86 = vmatprep.subr.mxu0 0.0
    %87 = vmatpush2.msra.mxu0 0.0
    %88 = vmatprep.subr.mxu0 0.0
    %89 = vmatpush2.msra.mxu0 0.0
    %90 = vmatprep.subr.mxu0 0.0
    %91 = vmatpush2.msra.mxu0 0.0
    %92 = vmatprep.subr.mxu0 0.0
    %93 = vmatpush2.msra.mxu0 0.0
    %94 = vmatprep.subr.mxu0 0.0
    %95 = vmatpush2.msra.mxu0 0.0
    %96 = vmatprep.subr.mxu0 0.0
    %97 = vmatpush2.msra.mxu0 0.0
    %98 = vmatprep.subr.mxu0 0.0
    %99 = vmatpush2.msra.mxu0 0.0
    %100 = vmatprep.subr.mxu0 0.0
    %101 = vmatpush2.msra.mxu0 0.0
    %102 = vmatprep.subr.mxu0 0.0
    %103 = vmatpush2.msra.mxu0 0.0
    %104 = vmatprep.subr.mxu0 0.0
    %105 = vmatpush2.msra.mxu0 0.0
    %106 = vmatprep.subr.mxu0 0.0
    %107 = vmatpush2.msra.mxu0 0.0
    %108 = vmatprep.subr.mxu0 0.0
    %109 = vmatpush2.msra.mxu0 0.0
    %110 = vmatprep.subr.mxu0 0.0
    %111 = vmatpush2.msra.mxu0 0.0
    %112 = vmatprep.subr.mxu0 0.0
    %113 = vmatpush2.msra.mxu0 0.0
    %114 = vmatprep.subr.mxu0 0.0
    %115 = vmatpush2.msra.mxu0 0.0
    %116 = vmatprep.mubr.f32.mxu0 0.0
    %117 = vmatmul.mubr.f32.gmra.mxu0 %v50
    %v118 = vpop.f32.mrf.mxu0
    %v119 = vadd.f32 %v41, %v118
    %v120 = vpop.f32.mrf.mxu0
    %v121 = vadd.f32 %v45, %v120
    %122 = vdwg.mxu0
    %v123 = vmax.f32 %v119, 0.0
    %v124 = vmax.f32 %v121, 0.0
    %v125 = vld [vmem:[%s3] sm:$0xff]
    %v126 = vld [vmem:[%s3 + $0x8] sm:$0xff]
    %v127 = vld [vmem:[%s3 + $0x10] sm:$0xff]
    %v128 = vld [vmem:[%s3 + $0x18] sm:$0xff]
    %v129 = vld [vmem:[%s3 + $0x20] sm:$0xff]
    %v130 = vld [vmem:[%s3 + $0x28] sm:$0xff]
    %v131 = vld [vmem:[%s3 + $0x30] sm:$0xff]
    %v132 = vld [vmem:[%s3 + $0x38] sm:$0xff]
    %v133 = vld [vmem:[%s3 + $0x40] sm:$0xff]
    %v134 = vld [vmem:[%s3 + $0x48] sm:$0xff]
    %v135 = vld [vmem:[%s3 + $0x50] sm:$0xff]
    %v136 = vld [vmem:[%s3 + $0x58] sm:$0xff]
    %v137 = vld [vmem:[%s3 + $0x60] sm:$0xff]
    %v138 = vld [vmem:[%s3 + $0x68] sm:$0xff]
    %v139 = vld [vmem:[%s3 + $0x70] sm:$0xff]
    %v140 = vld [vmem:[%s3 + $0x78] sm:$0xff]
    %v141 = vld [vmem:[%s3 + $0x80] sm:$0xff]
    %v142 = vld [vmem:[%s3 + $0x88] sm:$0xff]
    %v143 = vld [vmem:[%s3 + $0x90] sm:$0xff]
    %v144 = vld [vmem:[%s3 + $0x98] sm:$0xff]
    %v145 = vld [vmem:[%s3 + $0xa0] sm:$0xff]
    %v146 = vld [vmem:[%s3 + $0xa8] sm:$0xff]
    %v147 = vld [vmem:[%s3 + $0xb0] sm:$0xff]
    %v148 = vld [vmem:[%s3 + $0xb8] sm:$0xff]
    %v149 = vld [vmem:[%s3 + $0xc0] sm:$0xff]
    %v150 = vld [vmem:[%s3 + $0xc8] sm:$0xff]
    %v151 = vld [vmem:[%s3 + $0xd0] sm:$0xff]
    %v152 = vld [vmem:[%s3 + $0xd8] sm:$0xff]
    %v153 = vld [vmem:[%s3 + $0xe0] sm:$0xff]
    %v154 = vld [vmem:[%s3 + $0xe8] sm:$0xff]
    %v155 = vld [vmem:[%s3 + $0xf0] sm:$0xff]
    %v156 = vld [vmem:[%s3 + $0xf8] sm:$0xff]
    %v157 = vld [vmem:[%s3 + $0x100] sm:$0xff]
    %v158 = vld [vmem:[%s3 + $0x108] sm:$0xff]
    %v159 = vld [vmem:[%s3 + $0x110] sm:$0xff]
    %v160 = vld [vmem:[%s3 + $0x118] sm:$0xff]
    %v161 = vld [vmem:[%s3 + $0x120] sm:$0xff]
    %v162 = vld [vmem:[%s3 + $0x128] sm:$0xff]
    %v163 = vld [vmem:[%s3 + $0x130] sm:$0xff]
    %v164 = vld [vmem:[%s3 + $0x138] sm:$0xff]
    %v165 = vld [vmem:[%s3 + $0x140] sm:$0xff]
    %v166 = vld [vmem:[%s3 + $0x148] sm:$0xff]
    %v167 = vld [vmem:[%s3 + $0x150] sm:$0xff]
    %v168 = vld [vmem:[%s3 + $0x158] sm:$0xff]
    %v169 = vld [vmem:[%s3 + $0x160] sm:$0xff]
    %v170 = vld [vmem:[%s3 + $0x168] sm:$0xff]
    %v171 = vld [vmem:[%s3 + $0x170] sm:$0xff]
    %v172 = vld [vmem:[%s3 + $0x178] sm:$0xff]
    %v173 = vld [vmem:[%s3 + $0x180] sm:$0xff]
    %v174 = vld [vmem:[%s3 + $0x188] sm:$0xff]
    %v175 = vld [vmem:[%s3 + $0x190] sm:$0xff]
    %v176 = vld [vmem:[%s3 + $0x198] sm:$0xff]
    %v177 = vld [vmem:[%s3 + $0x1a0] sm:$0xff]
    %v178 = vld [vmem:[%s3 + $0x1a8] sm:$0xff]
    %v179 = vld [vmem:[%s3 + $0x1b0] sm:$0xff]
    %v180 = vld [vmem:[%s3 + $0x1b8] sm:$0xff]
    %v181 = vld [vmem:[%s3 + $0x1c0] sm:$0xff]
    %v182 = vld [vmem:[%s3 + $0x1c8] sm:$0xff]
    %v183 = vld [vmem:[%s3 + $0x1d0] sm:$0xff]
    %v184 = vld [vmem:[%s3 + $0x1d8] sm:$0xff]
    %v185 = vld [vmem:[%s3 + $0x1e0] sm:$0xff]
    %v186 = vld [vmem:[%s3 + $0x1e8] sm:$0xff]
    %v187 = vld [vmem:[%s3 + $0x1f0] sm:$0xff]
    %v188 = vld [vmem:[%s3 + $0x1f8] sm:$0xff]
    %v189 = vld [vmem:[%s4] sm:$0x3]
    %v191 = vlaneseq
    %v192 = vshrl.u32 %v191, 7
    %v193 = vsub.s32 0, %v192
    %v194 = vrot.slane %v189, %v193
    %v195 = vlaneseq
    %v196 = vshrl.u32 %v195, 7
    %v197 = vsub.s32 1, %v196
    %v198 = vrot.slane %v189, %v197
    %201 = vmatprep.subr.mxu0 %v156
    %202 = vmatpush1.msra.mxu0 %v155
    %203 = vmatprep.subr.mxu0 %v154
    %204 = vmatpush1.msra.mxu0 %v153
    %205 = vmatprep.subr.mxu0 %v152
    %206 = vmatpush1.msra.mxu0 %v151
    %207 = vmatprep.subr.mxu0 %v150
    %208 = vmatpush1.msra.mxu0 %v149
    %209 = vmatprep.subr.mxu0 %v148
    %210 = vmatpush1.msra.mxu0 %v147
    %211 = vmatprep.subr.mxu0 %v146
    %212 = vmatpush1.msra.mxu0 %v145
    %213 = vmatprep.subr.mxu0 %v144
    %214 = vmatpush1.msra.mxu0 %v143
    %215 = vmatprep.subr.mxu0 %v142
    %216 = vmatpush1.msra.mxu0 %v141
    %217 = vmatprep.subr.mxu0 %v140
    %218 = vmatpush1.msra.mxu0 %v139
    %219 = vmatprep.subr.mxu0 %v138
    %220 = vmatpush1.msra.mxu0 %v137
    %221 = vmatprep.subr.mxu0 %v136
    %222 = vmatpush1.msra.mxu0 %v135
    %223 = vmatprep.subr.mxu0 %v134
    %224 = vmatpush1.msra.mxu0 %v133
    %225 = vmatprep.subr.mxu0 %v132
    %226 = vmatpush1.msra.mxu0 %v131
    %227 = vmatprep.subr.mxu0 %v130
    %228 = vmatpush1.msra.mxu0 %v129
    %229 = vmatprep.subr.mxu0 %v128
    %230 = vmatpush1.msra.mxu0 %v127
    %231 = vmatprep.subr.mxu0 %v126
    %232 = vmatpush1.msra.mxu0 %v125
    %233 = vmatprep.subr.mxu0 %v188
    %234 = vmatpush2.msra.mxu0 %v187
    %235 = vmatprep.subr.mxu0 %v186
    %236 = vmatpush2.msra.mxu0 %v185
    %237 = vmatprep.subr.mxu0 %v184
    %238 = vmatpush2.msra.mxu0 %v183
    %239 = vmatprep.subr.mxu0 %v182
    %240 = vmatpush2.msra.mxu0 %v181
    %241 = vmatprep.subr.mxu0 %v180
    %242 = vmatpush2.msra.mxu0 %v179
    %243 = vmatprep.subr.mxu0 %v178
    %244 = vmatpush2.msra.mxu0 %v177
    %245 = vmatprep.subr.mxu0 %v176
    %246 = vmatpush2.msra.mxu0 %v175
    %247 = vmatprep.subr.mxu0 %v174
    %248 = vmatpush2.msra.mxu0 %v173
    %249 = vmatprep.subr.mxu0 %v172
    %250 = vmatpush2.msra.mxu0 %v171
    %251 = vmatprep.subr.mxu0 %v170
    %252 = vmatpush2.msra.mxu0 %v169
    %253 = vmatprep.subr.mxu0 %v168
    %254 = vmatpush2.msra.mxu0 %v167
    %255 = vmatprep.subr.mxu0 %v166
    %256 = vmatpush2.msra.mxu0 %v165
    %257 = vmatprep.subr.mxu0 %v164
    %258 = vmatpush2.msra.mxu0 %v163
    %259 = vmatprep.subr.mxu0 %v162
    %260 = vmatpush2.msra.mxu0 %v161
    %261 = vmatprep.subr.mxu0 %v160
    %262 = vmatpush2.msra.mxu0 %v159
    %263 = vmatprep.subr.mxu0 %v158
    %264 = vmatpush2.msra.mxu0 %v157
    %265 = vmatprep.mubr.f32.mxu0 %v124
    %266 = vmatmul.mubr.f32.gmra.mxu0 %v123
    %v267 = vpop.f32.mrf.mxu0
    %v268 = vadd.f32 %v194, %v267
    %v269 = vpop.f32.mrf.mxu0
    %v270 = vadd.f32 %v198, %v269
    %271 = vdwg.mxu0
    %v272 = vld [vmem:[%s5] sm:$0xff]
    %v273 = vld [vmem:[%s5 + $0x8] sm:$0xff]
    %v274 = vld [vmem:[%s5 + $0x10] sm:$0xff]
    %v275 = vld [vmem:[%s5 + $0x18] sm:$0xff]
    %v276 = vld [vmem:[%s5 + $0x20] sm:$0xff]
    %v277 = vld [vmem:[%s5 + $0x28] sm:$0xff]
    %v278 = vld [vmem:[%s5 + $0x30] sm:$0xff]
    %v279 = vld [vmem:[%s5 + $0x38] sm:$0xff]
    %v280 = vld [vmem:[%s5 + $0x40] sm:$0xff]
    %v281 = vld [vmem:[%s5 + $0x48] sm:$0xff]
    %v282 = vld [vmem:[%s5 + $0x50] sm:$0xff]
    %v283 = vld [vmem:[%s5 + $0x58] sm:$0xff]
    %v284 = vld [vmem:[%s5 + $0x60] sm:$0xff]
    %v285 = vld [vmem:[%s5 + $0x68] sm:$0xff]
    %v286 = vld [vmem:[%s5 + $0x70] sm:$0xff]
    %v287 = vld [vmem:[%s5 + $0x78] sm:$0xff]
    %v288 = vld [vmem:[%s5 + $0x80] sm:$0xff]
    %v289 = vld [vmem:[%s5 + $0x88] sm:$0xff]
    %v290 = vld [vmem:[%s6] sm:$0xff]
    %vm291 = vcmask 130048
    %v293 = vsel %vm291, %v270, 0
    %295 = vmatprep.subr.mxu0 0.0
    %296 = vmatpush1.msra.mxu0 %v287
    %297 = vmatprep.subr.mxu0 0.0
    %298 = vmatpush1.msra.mxu0 %v286
    %299 = vmatprep.subr.mxu0 0.0
    %300 = vmatpush1.msra.mxu0 %v285
    %301 = vmatprep.subr.mxu0 0.0
    %302 = vmatpush1.msra.mxu0 %v284
    %303 = vmatprep.subr.mxu0 0.0
    %304 = vmatpush1.msra.mxu0 %v283
    %305 = vmatprep.subr.mxu0 0.0
    %306 = vmatpush1.msra.mxu0 %v282
    %307 = vmatprep.subr.mxu0 0.0
    %308 = vmatpush1.msra.mxu0 %v281
    %309 = vmatprep.subr.mxu0 0.0
    %310 = vmatpush1.msra.mxu0 %v280
    %311 = vmatprep.subr.mxu0 0.0
    %312 = vmatpush1.msra.mxu0 %v279
    %313 = vmatprep.subr.mxu0 0.0
    %314 = vmatpush1.msra.mxu0 %v278
    %315 = vmatprep.subr.mxu0 0.0
    %316 = vmatpush1.msra.mxu0 %v277
    %317 = vmatprep.subr.mxu0 0.0
    %318 = vmatpush1.msra.mxu0 %v276
    %319 = vmatprep.subr.mxu0 0.0
    %320 = vmatpush1.msra.mxu0 %v275
    %321 = vmatprep.subr.mxu0 0.0
    %322 = vmatpush1.msra.mxu0 %v274
    %323 = vmatprep.subr.mxu0 0.0
    %324 = vmatpush1.msra.mxu0 %v273
    %325 = vmatprep.subr.mxu0 0.0
    %326 = vmatpush1.msra.mxu0 %v272
    %327 = vmatprep.subr.mxu0 0.0
    %328 = vmatpush2.msra.mxu0 0.0
    %329 = vmatprep.subr.mxu0 0.0
    %330 = vmatpush2.msra.mxu0 0.0
    %331 = vmatprep.subr.mxu0 0.0
    %332 = vmatpush2.msra.mxu0 0.0
    %333 = vmatprep.subr.mxu0 0.0
    %334 = vmatpush2.msra.mxu0 0.0
    %335 = vmatprep.subr.mxu0 0.0
    %336 = vmatpush2.msra.mxu0 0.0
    %337 = vmatprep.subr.mxu0 0.0
    %338 = vmatpush2.msra.mxu0 0.0
    %339 = vmatprep.subr.mxu0 0.0
    %340 = vmatpush2.msra.mxu0 0.0
    %341 = vmatprep.subr.mxu0 0.0
    %342 = vmatpush2.msra.mxu0 0.0
    %343 = vmatprep.subr.mxu0 0.0
    %344 = vmatpush2.msra.mxu0 0.0
    %345 = vmatprep.subr.mxu0 0.0
    %346 = vmatpush2.msra.mxu0 0.0
    %347 = vmatprep.subr.mxu0 0.0
    %348 = vmatpush2.msra.mxu0 0.0
    %349 = vmatprep.subr.mxu0 0.0
    %350 = vmatpush2.msra.mxu0 0.0
    %351 = vmatprep.subr.mxu0 0.0
    %352 = vmatpush2.msra.mxu0 0.0
    %353 = vmatprep.subr.mxu0 0.0
    %354 = vmatpush2.msra.mxu0 0.0
    %355 = vmatprep.subr.mxu0 0.0
    %356 = vmatpush2.msra.mxu0 %v289
    %357 = vmatprep.subr.mxu0 0.0
    %358 = vmatpush2.msra.mxu0 %v288
    %359 = vmatprep.mubr.f32.mxu0 %v293
    %360 = vmatmul.mubr.f32.gmra.mxu0 %v268
    %v361 = vpop.f32.mrf.mxu0
    %v362 = vadd.f32 0.0, %v361
    %v363 = vpop.f32.mrf.mxu0
    %364 = vdwg.mxu0
    %v366 = vcombine.high %v290, %v290
    %vm367 = vcmask 31744
    %v369 = vsel %vm367, %v362, 0
    %vm371 = vcmask 1043456
    %v372 = vsel %vm371, %v290, 0
    %v374 = vsel %vm371, %v366, 0
    %376 = vmatprep.subr.mxu0 0.0
    %377 = vmatpush1.msra.mxu0 0.0
    %378 = vmatprep.subr.mxu0 0.0
    %379 = vmatpush1.msra.mxu0 0.0
    %380 = vmatprep.subr.mxu0 0.0
    %381 = vmatpush1.msra.mxu0 0.0
    %382 = vmatprep.subr.mxu0 0.0
    %383 = vmatpush1.msra.mxu0 0.0
    %384 = vmatprep.subr.mxu0 0.0
    %385 = vmatpush1.msra.mxu0 0.0
    %386 = vmatprep.subr.mxu0 0.0
    %387 = vmatpush1.msra.mxu0 0.0
    %388 = vmatprep.subr.mxu0 0.0
    %389 = vmatpush1.msra.mxu0 0.0
    %390 = vmatprep.subr.mxu0 0.0
    %391 = vmatpush1.msra.mxu0 0.0
    %392 = vmatprep.subr.mxu0 0.0
    %393 = vmatpush1.msra.mxu0 0.0
    %394 = vmatprep.subr.mxu0 0.0
    %395 = vmatpush1.msra.mxu0 0.0
    %396 = vmatprep.subr.mxu0 0.0
    %397 = vmatpush1.msra.mxu0 0.0
    %398 = vmatprep.subr.mxu0 0.0
    %399 = vmatpush1.msra.mxu0 0.0
    %400 = vmatprep.subr.mxu0 0.0
    %401 = vmatpush1.msra.mxu0 0.0
    %402 = vmatprep.subr.mxu0 0.0
    %403 = vmatpush1.msra.mxu0 0.0
    %404 = vmatprep.subr.mxu0 0.0
    %405 = vmatpush1.msra.mxu0 0.0
    %406 = vmatprep.subr.mxu0 %v374
    %407 = vmatpush1.msra.mxu0 %v372
    %408 = vmatprep.subr.mxu0 0.0
    %409 = vmatpush2.msra.mxu0 0.0
    %410 = vmatprep.subr.mxu0 0.0
    %411 = vmatpush2.msra.mxu0 0.0
    %412 = vmatprep.subr.mxu0 0.0
    %413 = vmatpush2.msra.mxu0 0.0
    %414 = vmatprep.subr.mxu0 0.0
    %415 = vmatpush2.msra.mxu0 0.0
    %416 = vmatprep.subr.mxu0 0.0
    %417 = vmatpush2.msra.mxu0 0.0
    %418 = vmatprep.subr.mxu0 0.0
    %419 = vmatpush2.msra.mxu0 0.0
    %420 = vmatprep.subr.mxu0 0.0
    %421 = vmatpush2.msra.mxu0 0.0
    %422 = vmatprep.subr.mxu0 0.0
    %423 = vmatpush2.msra.mxu0 0.0
    %424 = vmatprep.subr.mxu0 0.0
    %425 = vmatpush2.msra.mxu0 0.0
    %426 = vmatprep.subr.mxu0 0.0
    %427 = vmatpush2.msra.mxu0 0.0
    %428 = vmatprep.subr.mxu0 0.0
    %429 = vmatpush2.msra.mxu0 0.0
    %430 = vmatprep.subr.mxu0 0.0
    %431 = vmatpush2.msra.mxu0 0.0
    %432 = vmatprep.subr.mxu0 0.0
    %433 = vmatpush2.msra.mxu0 0.0
    %434 = vmatprep.subr.mxu0 0.0
    %435 = vmatpush2.msra.mxu0 0.0
    %436 = vmatprep.subr.mxu0 0.0
    %437 = vmatpush2.msra.mxu0 0.0
    %438 = vmatprep.subr.mxu0 0.0
    %439 = vmatpush2.msra.mxu0 0.0
    %440 = vmatprep.mubr.f32.mxu0 0.0
    %441 = vmatmul.mubr.f32.gmra.mxu0 %v369
    %v442 = vpop.f32.mrf.mxu0
    %v443 = vadd.f32 0.0, %v442
    %v444 = vpop.f32.mrf.mxu0
    %v445 = vadd.f32 0.0, %v444
    %446 = vdwg.mxu0
    %v447 = vsub.f32 %v268, %v443
    %v448 = vsub.f32 %v270, %v445
    %v449 = vmul.f32 %v447, %v447
    %v450 = vmul.f32 %v448, %v448
    %v452 = vsel %vm291, %v450, 0
    %454 = vmatprep.subr.mxu0 0.0
    %455 = vmatpush1.msra.mxu0 %v287
    %456 = vmatprep.subr.mxu0 0.0
    %457 = vmatpush1.msra.mxu0 %v286
    %458 = vmatprep.subr.mxu0 0.0
    %459 = vmatpush1.msra.mxu0 %v285
    %460 = vmatprep.subr.mxu0 0.0
    %461 = vmatpush1.msra.mxu0 %v284
    %462 = vmatprep.subr.mxu0 0.0
    %463 = vmatpush1.msra.mxu0 %v283
    %464 = vmatprep.subr.mxu0 0.0
    %465 = vmatpush1.msra.mxu0 %v282
    %466 = vmatprep.subr.mxu0 0.0
    %467 = vmatpush1.msra.mxu0 %v281
    %468 = vmatprep.subr.mxu0 0.0
    %469 = vmatpush1.msra.mxu0 %v280
    %470 = vmatprep.subr.mxu0 0.0
    %471 = vmatpush1.msra.mxu0 %v279
    %472 = vmatprep.subr.mxu0 0.0
    %473 = vmatpush1.msra.mxu0 %v278
    %474 = vmatprep.subr.mxu0 0.0
    %475 = vmatpush1.msra.mxu0 %v277
    %476 = vmatprep.subr.mxu0 0.0
    %477 = vmatpush1.msra.mxu0 %v276
    %478 = vmatprep.subr.mxu0 0.0
    %479 = vmatpush1.msra.mxu0 %v275
    %480 = vmatprep.subr.mxu0 0.0
    %481 = vmatpush1.msra.mxu0 %v274
    %482 = vmatprep.subr.mxu0 0.0
    %483 = vmatpush1.msra.mxu0 %v273
    %484 = vmatprep.subr.mxu0 0.0
    %485 = vmatpush1.msra.mxu0 %v272
    %486 = vmatprep.subr.mxu0 0.0
    %487 = vmatpush2.msra.mxu0 0.0
    %488 = vmatprep.subr.mxu0 0.0
    %489 = vmatpush2.msra.mxu0 0.0
    %490 = vmatprep.subr.mxu0 0.0
    %491 = vmatpush2.msra.mxu0 0.0
    %492 = vmatprep.subr.mxu0 0.0
    %493 = vmatpush2.msra.mxu0 0.0
    %494 = vmatprep.subr.mxu0 0.0
    %495 = vmatpush2.msra.mxu0 0.0
    %496 = vmatprep.subr.mxu0 0.0
    %497 = vmatpush2.msra.mxu0 0.0
    %498 = vmatprep.subr.mxu0 0.0
    %499 = vmatpush2.msra.mxu0 0.0
    %500 = vmatprep.subr.mxu0 0.0
    %501 = vmatpush2.msra.mxu0 0.0
    %502 = vmatprep.subr.mxu0 0.0
    %503 = vmatpush2.msra.mxu0 0.0
    %504 = vmatprep.subr.mxu0 0.0
    %505 = vmatpush2.msra.mxu0 0.0
    %506 = vmatprep.subr.mxu0 0.0
    %507 = vmatpush2.msra.mxu0 0.0
    %508 = vmatprep.subr.mxu0 0.0
    %509 = vmatpush2.msra.mxu0 0.0
    %510 = vmatprep.subr.mxu0 0.0
    %511 = vmatpush2.msra.mxu0 0.0
    %512 = vmatprep.subr.mxu0 0.0
    %513 = vmatpush2.msra.mxu0 0.0
    %514 = vmatprep.subr.mxu0 0.0
    %515 = vmatpush2.msra.mxu0 %v289
    %516 = vmatprep.subr.mxu0 0.0
    %517 = vmatpush2.msra.mxu0 %v288
    %518 = vmatprep.mubr.f32.mxu0 %v452
    %519 = vmatmul.mubr.f32.gmra.mxu0 %v449
    %v520 = vpop.f32.mrf.mxu0
    %v521 = vadd.f32 0.0, %v520
    %v522 = vpop.f32.mrf.mxu0
    %523 = vdwg.mxu0
    %v525 = vsel %vm367, %v521, 0
    %527 = vmatprep.subr.mxu0 0.0
    %528 = vmatpush1.msra.mxu0 0.0
    %529 = vmatprep.subr.mxu0 0.0
    %530 = vmatpush1.msra.mxu0 0.0
    %531 = vmatprep.subr.mxu0 0.0
    %532 = vmatpush1.msra.mxu0 0.0
    %533 = vmatprep.subr.mxu0 0.0
    %534 = vmatpush1.msra.mxu0 0.0
    %535 = vmatprep.subr.mxu0 0.0
    %536 = vmatpush1.msra.mxu0 0.0
    %537 = vmatprep.subr.mxu0 0.0
    %538 = vmatpush1.msra.mxu0 0.0
    %539 = vmatprep.subr.mxu0 0.0
    %540 = vmatpush1.msra.mxu0 0.0
    %541 = vmatprep.subr.mxu0 0.0
    %542 = vmatpush1.msra.mxu0 0.0
    %543 = vmatprep.subr.mxu0 0.0
    %544 = vmatpush1.msra.mxu0 0.0
    %545 = vmatprep.subr.mxu0 0.0
    %546 = vmatpush1.msra.mxu0 0.0
    %547 = vmatprep.subr.mxu0 0.0
    %548 = vmatpush1.msra.mxu0 0.0
    %549 = vmatprep.subr.mxu0 0.0
    %550 = vmatpush1.msra.mxu0 0.0
    %551 = vmatprep.subr.mxu0 0.0
    %552 = vmatpush1.msra.mxu0 0.0
    %553 = vmatprep.subr.mxu0 0.0
    %554 = vmatpush1.msra.mxu0 0.0
    %555 = vmatprep.subr.mxu0 0.0
    %556 = vmatpush1.msra.mxu0 0.0
    %557 = vmatprep.subr.mxu0 %v374
    %558 = vmatpush1.msra.mxu0 %v372
    %559 = vmatprep.subr.mxu0 0.0
    %560 = vmatpush2.msra.mxu0 0.0
    %561 = vmatprep.subr.mxu0 0.0
    %562 = vmatpush2.msra.mxu0 0.0
    %563 = vmatprep.subr.mxu0 0.0
    %564 = vmatpush2.msra.mxu0 0.0
    %565 = vmatprep.subr.mxu0 0.0
    %566 = vmatpush2.msra.mxu0 0.0
    %567 = vmatprep.subr.mxu0 0.0
    %568 = vmatpush2.msra.mxu0 0.0
    %569 = vmatprep.subr.mxu0 0.0
    %570 = vmatpush2.msra.mxu0 0.0
    %571 = vmatprep.subr.mxu0 0.0
    %572 = vmatpush2.msra.mxu0 0.0
    %573 = vmatprep.subr.mxu0 0.0
    %574 = vmatpush2.msra.mxu0 0.0
    %575 = vmatprep.subr.mxu0 0.0
    %576 = vmatpush2.msra.mxu0 0.0
    %577 = vmatprep.subr.mxu0 0.0
    %578 = vmatpush2.msra.mxu0 0.0
    %579 = vmatprep.subr.mxu0 0.0
    %580 = vmatpush2.msra.mxu0 0.0
    %581 = vmatprep.subr.mxu0 0.0
    %582 = vmatpush2.msra.mxu0 0.0
    %583 = vmatprep.subr.mxu0 0.0
    %584 = vmatpush2.msra.mxu0 0.0
    %585 = vmatprep.subr.mxu0 0.0
    %586 = vmatpush2.msra.mxu0 0.0
    %587 = vmatprep.subr.mxu0 0.0
    %588 = vmatpush2.msra.mxu0 0.0
    %589 = vmatprep.subr.mxu0 0.0
    %590 = vmatpush2.msra.mxu0 0.0
    %591 = vmatprep.mubr.f32.mxu0 0.0
    %592 = vmatmul.mubr.f32.gmra.mxu0 %v525
    %v593 = vpop.f32.mrf.mxu0
    %v594 = vadd.f32 1e-05, %v593
    %v595 = vpop.f32.mrf.mxu0
    %v596 = vadd.f32 1e-05, %v595
    %597 = vdwg.mxu0
    %v598 = vrsqrt.pop %v594
    %v599 = vrsqrt.pop %v596
    %v600 = vmul.f32 %v447, %v598
    %v601 = vmul.f32 %v448, %v599
    %v602 = vld [vmem:[%s7] sm:$0x3]
    %v604 = vlaneseq
    %v605 = vshrl.u32 %v604, 7
    %v606 = vsub.s32 0, %v605
    %v607 = vrot.slane %v602, %v606
    %v608 = vlaneseq
    %v609 = vshrl.u32 %v608, 7
    %v610 = vsub.s32 1, %v609
    %v611 = vrot.slane %v602, %v610
    %v614 = vmul.f32 %v600, %v607
    %v615 = vmul.f32 %v601, %v611
    %v616 = vld [vmem:[%s8] sm:$0x3]
    %v618 = vlaneseq
    %v619 = vshrl.u32 %v618, 7
    %v620 = vsub.s32 0, %v619
    %v621 = vrot.slane %v616, %v620
    %v622 = vlaneseq
    %v623 = vshrl.u32 %v622, 7
    %v624 = vsub.s32 1, %v623
    %v625 = vrot.slane %v616, %v624
    %v628 = vadd.f32 %v614, %v621
    %v629 = vadd.f32 %v615, %v625
    %v632 = vcombine.low %v628, %v629
    %v634 = vunpack.c.l.s4 1983009808
    %v635 = vunpack.c.0.s8 %v634
    %v636 = vlaneseq
    %v637 = vshrl.u32 %v636, 7
    %v638 = vsub.s32 %v635, %v637
    %v639 = vrot.slane %v632, %v638
    %vm641 = vcmask 1041408
    %vm642 = vcmask 125954
    %vm643 = vmor %vm642, %vm641
    %644 = vst.msk [vmem:[#allocation2] sm:$0xf] %vm643, %v639
    // Predicated region
    $region38: #{tpu_custom_call.1} parent=1 // pred_check
      _
    $region39: #{tpu_custom_call.1} parent=1 // pred_check_branch
      %646 = sbr.rel (0) target = $region41
    $region40: #{tpu_custom_call.1} parent=1 // pred_region
      %s648 = ssub.s32 64, 64
      %649 = vsyncadd [#allocation3], %s648
      %s651 = sshll.u32 [#allocation2], 4
      %s652 = int_to_ptr.vmem [resolvable:$true] %s651
      %654 = dma.vmem_to_hbm [thread:$0]  %s652, 64, %s9, [#allocation3]
    $region41: #{tpu_custom_call.1} parent=1 // pred_fallthru
      _
    // Predicated region
    $region42: #{tpu_custom_call.1} parent=1 // pred_check
      _
    $region43: #{tpu_custom_call.1} parent=1 // pred_check_branch
      %656 = sbr.rel (0) target = $region45
    $region44: #{tpu_custom_call.1} parent=1 // pred_region
      %657 = dma.done [#allocation3], 64
    $region45: #{tpu_custom_call.1} parent=1 // pred_fallthru
      _
    %658 = vsyncpa [#allocation3], 1

</llo_original>
